<compile_context>
chip_gen: v7x
topology: tpu7x:2x2x1
jax: 0.10.0
libtpu: 0.0.40
codegen_flags: <defaults>
</compile_context>

<pallas_src>
import jax
import jax.numpy as jnp
from jax import lax
from jax.experimental import pallas as pl
from jax.experimental.pallas import tpu as pltpu


def _edgeconv_kernel(x_ref, xj_ref, w_self_ref, w_nbr_ref, b_ref, o_ref):
    # x_ref     : (C_in, TM)     bf16   node features (channels-first, lane-dense)
    # xj_ref    : (k, C_in, TM)  bf16   gathered neighbor features, one slab per slot
    # w_self_ref: (C_out, C_in)  f32    == W1 - W2   (acts on x_i; f32: cancellation-safe)
    # w_nbr_ref : (C_out, C_in)  bf16   == W2        (acts on x_j)
    # b_ref     : (C_out, 1)     f32    bias
    # o_ref     : (C_out, TM)    f32    aggregated node outputs
    k = xj_ref.shape[0]

    # Per-node term: computed once per tile, reused for all k edges of each node.
    self_term = jnp.dot(w_self_ref[...], x_ref[...].astype(jnp.float32),
                        preferred_element_type=jnp.float32) + b_ref[...]

    # Accumulate the k per-neighbor messages directly into the output block:
    # the ref round-trip bounds live ranges (no k concurrent (C_out, TM) f32 temps).
    o_ref[...] = jnp.zeros_like(o_ref)

    # TODO(synk): on v5e at large C_in/C_out (MXU-bound regime) the k small dots could
    # be merged into one wide (C_in, k*TM) dot to avoid re-pushing w_nbr per neighbor.
    def body(s, carry):
        h = jnp.dot(w_nbr_ref[...], xj_ref[s],
                    preferred_element_type=jnp.float32)      # bf16 MXU, f32 acc
        o_ref[...] += jnp.maximum(self_term + h, 0.0)         # ReLU + accumulate (VPU)
        return carry

    lax.fori_loop(0, k, body, 0, unroll=True)                 # k is small & static

    o_ref[...] *= (1.0 / k)                                    # aggr='mean'


def graph_conv_forward(x, edge_index, weight, bias, *, k,
                       channels_first_out=False, check_graph=False):
    """EdgeConv forward (GraphConv(conv='edge')).

    x          : [N, C_in] float32 node features.
    edge_index : [2, E] int32, E = N*k, sorted by target (edge_index[1]) with
                 exactly k edges per target node (k-regular static kNN graph).
    weight     : [C_out, 2*C_in]  (PyTorch Linear layout)
    bias       : [C_out]
    channels_first_out : if True, return (C_out, N) and skip the final transpose
                 (useful for v5e where the out-of-kernel transpose is not free).
    check_graph: if True, assert the target-sorted / k-regular assumption.
    """
    N, C_in = x.shape
    C_out = weight.shape[0]
    src, dst = edge_index[0], edge_index[1]

    if check_graph:
        expected = jnp.repeat(jnp.arange(N, dtype=dst.dtype), k)
        assert bool(jnp.all(dst == expected)), (
            "edge_index must be target-sorted with exactly k edges per node")

    # Neighbor table (valid because edges are target-sorted, fixed degree k).
    nbr = src.reshape(N, k)

    # W-split: W @ concat(x_i, x_j - x_i) = (W1 - W2) @ x_i + W2 @ x_j.
    w1 = weight[:, :C_in]
    w2 = weight[:, C_in:]
    w_self = (w1 - w2).astype(jnp.float32)             # (C_out, C_in), kept f32
    w_nbr = w2.astype(jnp.bfloat16)                     # (C_out, C_in)
    b_col = bias.reshape(C_out, 1).astype(jnp.float32)

    # Cast to bf16 BEFORE the gather so the dominant (k, C_in, N) neighbor tensor is
    # produced (and read back by the kernel) at 2 B/elem with no f32 intermediate.
    x_bf = x.astype(jnp.bfloat16)
    x_cf = x_bf.T                                                       # (C_in, N)
    # TODO(synk): this x[src] gather still runs in XLA (one bf16 HBM round-trip of the
    # largest tensor). Moving it in-kernel (scalar-prefetched nbr table + VMEM-resident
    # x + DMA/take gather) would remove it, but generic dynamic gathers do not lower
    # reliably in Mosaic, so it stays wrapper-side for robustness.
    xj_cf = jnp.transpose(x_cf[:, nbr.T], (1, 0, 2))                    # (k, C_in, N)

    # ---- node-axis tiling derived from a VMEM budget ------------------------------
    try:
        vmem_cap = int(pltpu.get_tpu_info().vmem_capacity_bytes)
    except Exception:  # no TPU info available -> assume the smallest budget (v7x 64 MiB)
        vmem_cap = 64 * 1024 * 1024
    budget = min(vmem_cap - 12 * 1024 * 1024, 96 * 1024 * 1024)

    # Per-node VMEM bytes: xj (x2 buffers, bf16) + x (x2, bf16) + out (x2, f32)
    # + self_term and one matmul temp (f32).  Fixed: double-buffered weights + slack.
    per_node = 2 * (k * C_in * 2) + 2 * (C_in * 2) + 2 * (C_out * 4) + 2 * (C_out * 4)
    fixed = 2 * C_out * C_in * (2 + 4) + (1 << 16)

    if N <= 512:
        tm, n_pad = N, N                      # single tile; full-axis block is legal
    else:
        tm = (max(budget - fixed, per_node) // per_node) // 128 * 128
        # Keep >=2 node tiles when N allows, so ("parallel",) can load both v7x
        # TensorCores, but never shrink tiles below 512 (HBM roofline falls off fast).
        half = -(-((N + 1) // 2) // 128) * 128        # ~N/2 rounded up to 128
        tm = max(256, min(tm, 2048, max(512, half)))
        n_pad = pl.cdiv(N, tm) * tm
        if n_pad != N:                        # pad (never drop) trailing nodes
            x_cf = jnp.pad(x_cf, ((0, 0), (0, n_pad - N)))
            xj_cf = jnp.pad(xj_cf, ((0, 0), (0, 0), (0, n_pad - N)))

    footprint = fixed + per_node * tm
    vmem_limit = int(min(vmem_cap, max(32 * 1024 * 1024, footprint + 8 * 1024 * 1024)))

    grid = (n_pad // tm,)

    # TODO(synk): on v6e/v5e (128 MiB VMEM) the xj spec could use
    # pipeline_mode=pl.Buffered(3) for deeper buffering of the one big streamed operand.
    out_cf = pl.pallas_call(
        _edgeconv_kernel,
        out_shape=jax.ShapeDtypeStruct((C_out, n_pad), jnp.float32),
        grid_spec=pltpu.PrefetchScalarGridSpec(
            num_scalar_prefetch=0,
            grid=grid,
            in_specs=[
                pl.BlockSpec((C_in, tm), lambda i: (0, i)),
                pl.BlockSpec((k, C_in, tm), lambda i: (0, 0, i)),
                pl.BlockSpec((C_out, C_in), lambda i: (0, 0)),
                pl.BlockSpec((C_out, C_in), lambda i: (0, 0)),
                pl.BlockSpec((C_out, 1), lambda i: (0, 0)),
            ],
            out_specs=pl.BlockSpec((C_out, tm), lambda i: (0, i)),
        ),
        compiler_params=pltpu.CompilerParams(
            dimension_semantics=("parallel",),   # shard node tiles across TCs (v7x)
            vmem_limit_bytes=vmem_limit,         # sized from the actual footprint
        ),
    )(x_cf, xj_cf, w_self, w_nbr, b_col)

    if channels_first_out:
        return out_cf[:, :N]                     # (C_out, N), no transpose
    return out_cf[:, :N].T                       # back to [N, C_out]


def _reference(x, edge_index, weight, bias, k):
    src, dst = edge_index[0], edge_index[1]
    xi = x[dst]
    xj = x[src]
    msg = jnp.concatenate([xi, xj - xi], axis=-1)
    h = jnp.maximum(msg @ weight.T + bias, 0.0)
    return h.reshape(x.shape[0], k, -1).mean(axis=1)


if __name__ == "__main__":
    key = jax.random.PRNGKey(0)
    k_x, k_w, k_b = jax.random.split(key, 3)

    N = 32          # number of graph nodes
    C_in = 8        # in_channels
    C_out = 16      # out_channels
    K = 4           # neighbors per node (k-regular static graph)

    x = jax.random.normal(k_x, (N, C_in), dtype=jnp.float32)

    # Deterministic k-regular "knn-style" graph: node i's neighbors are
    # (i+1, ..., i+K) mod N.  Edges sorted by target node (required assumption).
    dst = jnp.repeat(jnp.arange(N, dtype=jnp.int32), K)
    src = (dst + jnp.tile(jnp.arange(1, K + 1, dtype=jnp.int32), N)) % N
    edge_index = jnp.stack([src, dst], axis=0)          # [2, E], E = N*K

    # Deterministic Linear(2*C_in -> C_out, bias=True) params (PyTorch-style uniform).
    fan_in = 2 * C_in
    bound = 1.0 / jnp.sqrt(jnp.float32(fan_in))
    weight = jax.random.uniform(k_w, (C_out, 2 * C_in), jnp.float32, -bound, bound)
    bias = jax.random.uniform(k_b, (C_out,), jnp.float32, -bound, bound)

    out = graph_conv_forward(x, edge_index, weight, bias, k=K, check_graph=True)
    out = jax.block_until_ready(out)

    ref = _reference(x, edge_index, weight, bias, K)
    assert out.shape == (N, C_out)
    # bf16 matmul operands (x / x_j path) with f32 accumulation -> loosened tolerance.
    assert jnp.allclose(out, ref, atol=3e-2, rtol=3e-2), float(jnp.max(jnp.abs(out - ref)))

    print("KERNEL_OK")
</pallas_src>

<mosaic_0001>
module attributes {stable_mosaic.version = 11 : i64} {
  func.func @_edgeconv_kernel(%arg0: i32, %arg1: memref<8x32xbf16, #tpu.memory_space<vmem>>, %arg2: memref<4x8x32xbf16, #tpu.memory_space<vmem>>, %arg3: memref<16x8xf32, #tpu.memory_space<vmem>>, %arg4: memref<16x8xbf16, #tpu.memory_space<vmem>>, %arg5: memref<16x1xf32, #tpu.memory_space<vmem>>, %arg6: memref<16x32xf32, #tpu.memory_space<vmem>>) attributes {dimension_semantics = [#tpu.dimension_semantics<parallel>], iteration_bounds = array<i64: 1>, scalar_prefetch = 0 : i64, scratch_operands = 0 : i64, tpu.core_type = #tpu.core_type<tc>, window_params = [{transform_indices = @transform_0, window_bounds = array<i64: 8, 32>}, {transform_indices = @transform_1, window_bounds = array<i64: 4, 8, 32>}, {pipeline_mode = #tpu.pipeline_mode<synchronous>, transform_indices = @transform_2, window_bounds = array<i64: 16, 8>}, {pipeline_mode = #tpu.pipeline_mode<synchronous>, transform_indices = @transform_3, window_bounds = array<i64: 16, 8>}, {pipeline_mode = #tpu.pipeline_mode<synchronous>, transform_indices = @transform_4, window_bounds = array<i64: 16, 1>}, {transform_indices = @transform_5, window_bounds = array<i64: 16, 32>}]} {
    %c0 = arith.constant 0 : index
    %c0_0 = arith.constant 0 : index
    %0 = vector.load %arg3[%c0, %c0_0] : memref<16x8xf32, #tpu.memory_space<vmem>>, vector<16x8xf32>
    %c0_1 = arith.constant 0 : index
    %c0_2 = arith.constant 0 : index
    %1 = vector.load %arg1[%c0_1, %c0_2] : memref<8x32xbf16, #tpu.memory_space<vmem>>, vector<8x32xbf16>
    %2 = arith.extf %1 : vector<8x32xbf16> to vector<8x32xf32>
    %cst = arith.constant dense<0.000000e+00> : vector<16x32xf32>
    %3 = tpu.matmul %0, %2, %cst {dimension_numbers = #tpu.dot_dimension_numbers<[1], [0], [0], [1], [0, 0, 1, 1], [], []>} : vector<16x8xf32>, vector<8x32xf32>, vector<16x32xf32> -> vector<16x32xf32>
    %c0_3 = arith.constant 0 : index
    %c0_4 = arith.constant 0 : index
    %4 = vector.load %arg5[%c0_3, %c0_4] : memref<16x1xf32, #tpu.memory_space<vmem>>, vector<16x1xf32>
    %5 = vector.broadcast %4 : vector<16x1xf32> to vector<16x32xf32>
    %6 = arith.addf %3, %5 : vector<16x32xf32>
    %cst_5 = arith.constant 0.000000e+00 : f32
    %7 = vector.broadcast %cst_5 : f32 to vector<16x32xf32>
    %c0_6 = arith.constant 0 : index
    %c0_7 = arith.constant 0 : index
    %8 = vector.load %arg6[%c0_6, %c0_7] : memref<16x32xf32, #tpu.memory_space<vmem>>, vector<16x32xf32>
    tpu.vector_store %arg6[%c0_6, %c0_7], %7 {strides = array<i32>} : memref<16x32xf32, #tpu.memory_space<vmem>>, vector<16x32xf32>,
    %c0_i32 = arith.constant 0 : i32
    %c0_8 = arith.constant 0 : index
    %c0_9 = arith.constant 0 : index
    %9 = vector.load %arg4[%c0_8, %c0_9] : memref<16x8xbf16, #tpu.memory_space<vmem>>, vector<16x8xbf16>
    %10 = arith.index_cast %c0_i32 : i32 to index
    %c0_10 = arith.constant 0 : index
    %c0_11 = arith.constant 0 : index
    %11 = vector.load %arg2[%10, %c0_10, %c0_11] : memref<4x8x32xbf16, #tpu.memory_space<vmem>>, vector<1x8x32xbf16>
    %12 = vector.shape_cast %11 : vector<1x8x32xbf16> to vector<8x32xbf16>
    %cst_12 = arith.constant dense<0.000000e+00> : vector<16x32xf32>
    %13 = tpu.matmul %9, %12, %cst_12 {dimension_numbers = #tpu.dot_dimension_numbers<[1], [0], [0], [1], [0, 0, 1, 1], [], []>} : vector<16x8xbf16>, vector<8x32xbf16>, vector<16x32xf32> -> vector<16x32xf32>
    %c0_13 = arith.constant 0 : index
    %c0_14 = arith.constant 0 : index
    %14 = vector.load %arg6[%c0_13, %c0_14] : memref<16x32xf32, #tpu.memory_space<vmem>>, vector<16x32xf32>
    %15 = arith.addf %6, %13 : vector<16x32xf32>
    %cst_15 = arith.constant 0.000000e+00 : f32
    %16 = vector.broadcast %cst_15 : f32 to vector<16x32xf32>
    %17 = arith.maximumf %15, %16 : vector<16x32xf32>
    %18 = arith.addf %14, %17 : vector<16x32xf32>
    %c0_16 = arith.constant 0 : index
    %c0_17 = arith.constant 0 : index
    %19 = vector.load %arg6[%c0_16, %c0_17] : memref<16x32xf32, #tpu.memory_space<vmem>>, vector<16x32xf32>
    tpu.vector_store %arg6[%c0_16, %c0_17], %18 {strides = array<i32>} : memref<16x32xf32, #tpu.memory_space<vmem>>, vector<16x32xf32>,
    %c1_i32 = arith.constant 1 : i32
    %c0_18 = arith.constant 0 : index
    %c0_19 = arith.constant 0 : index
    %20 = vector.load %arg4[%c0_18, %c0_19] : memref<16x8xbf16, #tpu.memory_space<vmem>>, vector<16x8xbf16>
    %21 = arith.index_cast %c1_i32 : i32 to index
    %c0_20 = arith.constant 0 : index
    %c0_21 = arith.constant 0 : index
    %22 = vector.load %arg2[%21, %c0_20, %c0_21] : memref<4x8x32xbf16, #tpu.memory_space<vmem>>, vector<1x8x32xbf16>
    %23 = vector.shape_cast %22 : vector<1x8x32xbf16> to vector<8x32xbf16>
    %cst_22 = arith.constant dense<0.000000e+00> : vector<16x32xf32>
    %24 = tpu.matmul %20, %23, %cst_22 {dimension_numbers = #tpu.dot_dimension_numbers<[1], [0], [0], [1], [0, 0, 1, 1], [], []>} : vector<16x8xbf16>, vector<8x32xbf16>, vector<16x32xf32> -> vector<16x32xf32>
    %c0_23 = arith.constant 0 : index
    %c0_24 = arith.constant 0 : index
    %25 = vector.load %arg6[%c0_23, %c0_24] : memref<16x32xf32, #tpu.memory_space<vmem>>, vector<16x32xf32>
    %26 = arith.addf %6, %24 : vector<16x32xf32>
    %cst_25 = arith.constant 0.000000e+00 : f32
    %27 = vector.broadcast %cst_25 : f32 to vector<16x32xf32>
    %28 = arith.maximumf %26, %27 : vector<16x32xf32>
    %29 = arith.addf %25, %28 : vector<16x32xf32>
    %c0_26 = arith.constant 0 : index
    %c0_27 = arith.constant 0 : index
    %30 = vector.load %arg6[%c0_26, %c0_27] : memref<16x32xf32, #tpu.memory_space<vmem>>, vector<16x32xf32>
    tpu.vector_store %arg6[%c0_26, %c0_27], %29 {strides = array<i32>} : memref<16x32xf32, #tpu.memory_space<vmem>>, vector<16x32xf32>,
    %c2_i32 = arith.constant 2 : i32
    %c0_28 = arith.constant 0 : index
    %c0_29 = arith.constant 0 : index
    %31 = vector.load %arg4[%c0_28, %c0_29] : memref<16x8xbf16, #tpu.memory_space<vmem>>, vector<16x8xbf16>
    %32 = arith.index_cast %c2_i32 : i32 to index
    %c0_30 = arith.constant 0 : index
    %c0_31 = arith.constant 0 : index
    %33 = vector.load %arg2[%32, %c0_30, %c0_31] : memref<4x8x32xbf16, #tpu.memory_space<vmem>>, vector<1x8x32xbf16>
    %34 = vector.shape_cast %33 : vector<1x8x32xbf16> to vector<8x32xbf16>
    %cst_32 = arith.constant dense<0.000000e+00> : vector<16x32xf32>
    %35 = tpu.matmul %31, %34, %cst_32 {dimension_numbers = #tpu.dot_dimension_numbers<[1], [0], [0], [1], [0, 0, 1, 1], [], []>} : vector<16x8xbf16>, vector<8x32xbf16>, vector<16x32xf32> -> vector<16x32xf32>
    %c0_33 = arith.constant 0 : index
    %c0_34 = arith.constant 0 : index
    %36 = vector.load %arg6[%c0_33, %c0_34] : memref<16x32xf32, #tpu.memory_space<vmem>>, vector<16x32xf32>
    %37 = arith.addf %6, %35 : vector<16x32xf32>
    %cst_35 = arith.constant 0.000000e+00 : f32
    %38 = vector.broadcast %cst_35 : f32 to vector<16x32xf32>
    %39 = arith.maximumf %37, %38 : vector<16x32xf32>
    %40 = arith.addf %36, %39 : vector<16x32xf32>
    %c0_36 = arith.constant 0 : index
    %c0_37 = arith.constant 0 : index
    %41 = vector.load %arg6[%c0_36, %c0_37] : memref<16x32xf32, #tpu.memory_space<vmem>>, vector<16x32xf32>
    tpu.vector_store %arg6[%c0_36, %c0_37], %40 {strides = array<i32>} : memref<16x32xf32, #tpu.memory_space<vmem>>, vector<16x32xf32>,
    %c3_i32 = arith.constant 3 : i32
    %c0_38 = arith.constant 0 : index
    %c0_39 = arith.constant 0 : index
    %42 = vector.load %arg4[%c0_38, %c0_39] : memref<16x8xbf16, #tpu.memory_space<vmem>>, vector<16x8xbf16>
    %43 = arith.index_cast %c3_i32 : i32 to index
    %c0_40 = arith.constant 0 : index
    %c0_41 = arith.constant 0 : index
    %44 = vector.load %arg2[%43, %c0_40, %c0_41] : memref<4x8x32xbf16, #tpu.memory_space<vmem>>, vector<1x8x32xbf16>
    %45 = vector.shape_cast %44 : vector<1x8x32xbf16> to vector<8x32xbf16>
    %cst_42 = arith.constant dense<0.000000e+00> : vector<16x32xf32>
    %46 = tpu.matmul %42, %45, %cst_42 {dimension_numbers = #tpu.dot_dimension_numbers<[1], [0], [0], [1], [0, 0, 1, 1], [], []>} : vector<16x8xbf16>, vector<8x32xbf16>, vector<16x32xf32> -> vector<16x32xf32>
    %c0_43 = arith.constant 0 : index
    %c0_44 = arith.constant 0 : index
    %47 = vector.load %arg6[%c0_43, %c0_44] : memref<16x32xf32, #tpu.memory_space<vmem>>, vector<16x32xf32>
    %48 = arith.addf %6, %46 : vector<16x32xf32>
    %cst_45 = arith.constant 0.000000e+00 : f32
    %49 = vector.broadcast %cst_45 : f32 to vector<16x32xf32>
    %50 = arith.maximumf %48, %49 : vector<16x32xf32>
    %51 = arith.addf %47, %50 : vector<16x32xf32>
    %c0_46 = arith.constant 0 : index
    %c0_47 = arith.constant 0 : index
    %52 = vector.load %arg6[%c0_46, %c0_47] : memref<16x32xf32, #tpu.memory_space<vmem>>, vector<16x32xf32>
    tpu.vector_store %arg6[%c0_46, %c0_47], %51 {strides = array<i32>} : memref<16x32xf32, #tpu.memory_space<vmem>>, vector<16x32xf32>,
    %c4_i32 = arith.constant 4 : i32
    %c0_48 = arith.constant 0 : index
    %c0_49 = arith.constant 0 : index
    %53 = vector.load %arg6[%c0_48, %c0_49] : memref<16x32xf32, #tpu.memory_space<vmem>>, vector<16x32xf32>
    %cst_50 = arith.constant 2.500000e-01 : f32
    %54 = vector.broadcast %cst_50 : f32 to vector<16x32xf32>
    %55 = arith.mulf %53, %54 : vector<16x32xf32>
    %c0_51 = arith.constant 0 : index
    %c0_52 = arith.constant 0 : index
    %56 = vector.load %arg6[%c0_51, %c0_52] : memref<16x32xf32, #tpu.memory_space<vmem>>, vector<16x32xf32>
    tpu.vector_store %arg6[%c0_51, %c0_52], %55 {strides = array<i32>} : memref<16x32xf32, #tpu.memory_space<vmem>>, vector<16x32xf32>,
    return
  }
  func.func @transform_0(%arg0: i32) -> (i32, i32) {
    %c0_i32 = arith.constant 0 : i32
    %c0_i32_0 = arith.constant 0 : i32
    return %c0_i32, %arg0 : i32, i32
  }
  func.func @transform_1(%arg0: i32) -> (i32, i32, i32) {
    %c0_i32 = arith.constant 0 : i32
    %c0_i32_0 = arith.constant 0 : i32
    %c0_i32_1 = arith.constant 0 : i32
    return %c0_i32, %c0_i32_0, %arg0 : i32, i32, i32
  }
  func.func @transform_2(%arg0: i32) -> (i32, i32) {
    %c0_i32 = arith.constant 0 : i32
    %c0_i32_0 = arith.constant 0 : i32
    %c0_i32_1 = arith.constant 0 : i32
    return %c0_i32, %c0_i32_0 : i32, i32
  }
  func.func @transform_3(%arg0: i32) -> (i32, i32) {
    %c0_i32 = arith.constant 0 : i32
    %c0_i32_0 = arith.constant 0 : i32
    %c0_i32_1 = arith.constant 0 : i32
    return %c0_i32, %c0_i32_0 : i32, i32
  }
  func.func @transform_4(%arg0: i32) -> (i32, i32) {
    %c0_i32 = arith.constant 0 : i32
    %c0_i32_0 = arith.constant 0 : i32
    %c0_i32_1 = arith.constant 0 : i32
    return %c0_i32, %c0_i32_0 : i32, i32
  }
  func.func @transform_5(%arg0: i32) -> (i32, i32) {
    %c0_i32 = arith.constant 0 : i32
    %c0_i32_0 = arith.constant 0 : i32
    return %c0_i32, %arg0 : i32, i32
  }
}

</mosaic_0001>

<llo_original>
// kernel: tpu_custom_call.1
$region0: #{tpu_custom_call.1}
  #allocation0 [shape = 'u32[]', space=smem, size = 0x4, offset = 0x4, fixed_abs, tag = 'smem constant byte address 0x4 - core index']
  #allocation1 [shape = 'u32[144,128]{1,0:T(1,128)}', space=vmem, size = 0x12000, scoped, tag = 'internal scratch']
  %s0 = inlined_call_operand.vmem [shape: bf16[8,32], index: 0, kind: input, shape index: {}]
  %s1 = inlined_call_operand.vmem [shape: bf16[4,8,32], index: 1, kind: input, shape index: {}]
  %s2 = inlined_call_operand.vmem [shape: f32[16,8], index: 2, kind: input, shape index: {}]
  %s3 = inlined_call_operand.vmem [shape: bf16[16,8], index: 3, kind: input, shape index: {}]
  %s4 = inlined_call_operand.vmem [shape: f32[16,1], index: 4, kind: input, shape index: {}]
  %s5 = inlined_call_operand.hbm [shape: f32[16,32], index: 5, kind: output, shape index: {}]
  %s6 = sld [smem:[#allocation0]]
  $region30: #{tpu_custom_call.1} parent=0
    _
  %s8 = ssub.s32 1, %s6
  %s9 = scalar_select 0, %s8, %s6
  $region1: #{tpu_custom_call.1} parent=0
    #allocation2 [shape = 'u8[8192]{0}', space=vmem, size = 0x2000, scoped, tag = 'output window, operand 0, single buffered']
    #allocation3 [shape = 's32[1]{0}', space=sflag, size = 0x4, scoped, tag = 'scoped memory for tpu_custom_call.1']
    %10 = vsyncpa [#allocation3], 0
    // Predicated region
    $region2: #{tpu_custom_call.1} parent=1 // pred_check
      _
    $region3: #{tpu_custom_call.1} parent=1 // pred_check_branch
      %12 = sbr.rel (0) target = $region5
    $region4: #{tpu_custom_call.1} parent=1 // pred_region
      _
    $region5: #{tpu_custom_call.1} parent=1 // pred_fallthru
      _
    // Predicated region
    $region6: #{tpu_custom_call.1} parent=1 // pred_check
      _
    $region7: #{tpu_custom_call.1} parent=1 // pred_check_branch
      %14 = sbr.rel (0) target = $region9
    $region8: #{tpu_custom_call.1} parent=1 // pred_region
      _
    $region9: #{tpu_custom_call.1} parent=1 // pred_fallthru
      _
    // Predicated region
    $region10: #{tpu_custom_call.1} parent=1 // pred_check
      _
    $region11: #{tpu_custom_call.1} parent=1 // pred_check_branch
      %16 = sbr.rel (0) target = $region13
    $region12: #{tpu_custom_call.1} parent=1 // pred_region
      _
    $region13: #{tpu_custom_call.1} parent=1 // pred_fallthru
      _
    // Predicated region
    $region14: #{tpu_custom_call.1} parent=1 // pred_check
      _
    $region15: #{tpu_custom_call.1} parent=1 // pred_check_branch
      %18 = sbr.rel (0) target = $region17
    $region16: #{tpu_custom_call.1} parent=1 // pred_region
      _
    $region17: #{tpu_custom_call.1} parent=1 // pred_fallthru
      _
    // Predicated region
    $region18: #{tpu_custom_call.1} parent=1 // pred_check
      _
    $region19: #{tpu_custom_call.1} parent=1 // pred_check_branch
      %20 = sbr.rel (0) target = $region21
    $region20: #{tpu_custom_call.1} parent=1 // pred_region
      _
    $region21: #{tpu_custom_call.1} parent=1 // pred_fallthru
      _
    %v22 = vld [vmem:[%s2] sm:$0xff]
    %v23 = vld [vmem:[%s2 + $0x8] sm:$0xff]
    %v24 = vld [vmem:[%s0] sm:$0xf]
    %v25 = vunpack.c.l.bf16 %v24
    %v26 = vld [vmem:[%s4] sm:$0xff]
    %v27 = vld [vmem:[%s4 + $0x8] sm:$0xff]
    %29 = vset.pattern.permute.xlu0 0
    %30 = vperm.xlu0 %29, %v26
    %v31 = vpop.permute.xlu0 %30
    %34 = vset.pattern.permute.xlu0 0
    %35 = vperm.xlu0 %34, %v27
    %v36 = vpop.permute.xlu0 %35
    %vm38 = vcmask 64512
    %v40 = vsel %vm38, %v22, 0
    %v43 = vsel %vm38, %v23, 0
    %45 = vmatprep.subr.mxu0 0.0
    %46 = vmatpush1.msra.mxu0 %v25
    %47 = vmatprep.subr.mxu0 0.0
    %48 = vmatpush1.msra.mxu0 0.0
    %49 = vmatprep.subr.mxu0 0.0
    %50 = vmatpush1.msra.mxu0 0.0
    %51 = vmatprep.subr.mxu0 0.0
    %52 = vmatpush1.msra.mxu0 0.0
    %53 = vmatprep.subr.mxu0 0.0
    %54 = vmatpush1.msra.mxu0 0.0
    %55 = vmatprep.subr.mxu0 0.0
    %56 = vmatpush1.msra.mxu0 0.0
    %57 = vmatprep.subr.mxu0 0.0
    %58 = vmatpush1.msra.mxu0 0.0
    %59 = vmatprep.subr.mxu0 0.0
    %60 = vmatpush1.msra.mxu0 0.0
    %61 = vmatprep.subr.mxu0 0.0
    %62 = vmatpush1.msra.mxu0 0.0
    %63 = vmatprep.subr.mxu0 0.0
    %64 = vmatpush1.msra.mxu0 0.0
    %65 = vmatprep.subr.mxu0 0.0
    %66 = vmatpush1.msra.mxu0 0.0
    %67 = vmatprep.subr.mxu0 0.0
    %68 = vmatpush1.msra.mxu0 0.0
    %69 = vmatprep.subr.mxu0 0.0
    %70 = vmatpush1.msra.mxu0 0.0
    %71 = vmatprep.subr.mxu0 0.0
    %72 = vmatpush1.msra.mxu0 0.0
    %73 = vmatprep.subr.mxu0 0.0
    %74 = vmatpush1.msra.mxu0 0.0
    %75 = vmatprep.subr.mxu0 0.0
    %76 = vmatpush1.msra.mxu0 0.0
    %77 = vmatprep.subr.mxu0 0.0
    %78 = vmatpush1.msra.mxu0 0.0
    %79 = vmatprep.subr.mxu0 0.0
    %80 = vmatpush1.msra.mxu0 0.0
    %81 = vmatprep.subr.mxu0 0.0
    %82 = vmatpush1.msra.mxu0 0.0
    %83 = vmatprep.subr.mxu0 0.0
    %84 = vmatpush1.msra.mxu0 0.0
    %85 = vmatprep.subr.mxu0 0.0
    %86 = vmatpush1.msra.mxu0 0.0
    %87 = vmatprep.subr.mxu0 0.0
    %88 = vmatpush1.msra.mxu0 0.0
    %89 = vmatprep.subr.mxu0 0.0
    %90 = vmatpush1.msra.mxu0 0.0
    %91 = vmatprep.subr.mxu0 0.0
    %92 = vmatpush1.msra.mxu0 0.0
    %93 = vmatprep.subr.mxu0 0.0
    %94 = vmatpush1.msra.mxu0 0.0
    %95 = vmatprep.subr.mxu0 0.0
    %96 = vmatpush1.msra.mxu0 0.0
    %97 = vmatprep.subr.mxu0 0.0
    %98 = vmatpush1.msra.mxu0 0.0
    %99 = vmatprep.subr.mxu0 0.0
    %100 = vmatpush1.msra.mxu0 0.0
    %101 = vmatprep.subr.mxu0 0.0
    %102 = vmatpush1.msra.mxu0 0.0
    %103 = vmatprep.subr.mxu0 0.0
    %104 = vmatpush1.msra.mxu0 0.0
    %105 = vmatprep.subr.mxu0 0.0
    %106 = vmatpush1.msra.mxu0 0.0
    %107 = vmatprep.subr.mxu0 0.0
    %108 = vmatpush1.msra.mxu0 0.0
    %109 = vmatprep.mubr.f32.mxu0 0.0
    %110 = vmatmul.mubr.f32.gmra.mrb[0].mxu0 %v40
    %v111 = vpop.f32.mrb[0].mxu0
    %v112 = vadd.f32 %v31, %v111
    %v113 = vpop.f32.mrb[0].mxu0
    %114 = vmatprep.mubr.f32.mxu0 0.0
    %115 = vmatmul.mubr.f32.gmra.mrb[0].mxu0 %v43
    %v116 = vpop.f32.mrb[0].mxu0
    %v117 = vadd.f32 %v36, %v116
    %v118 = vpop.f32.mrb[0].mxu0
    %119 = vdwg.mxu0
    %vm120 = vcmask 261120
    %121 = vst.msk [vmem:[#allocation2] sm:$0xff] %vm120, 0.0
    %122 = vst.msk [vmem:[#allocation2 + $0x8] sm:$0xff] %vm120, 0.0
    %v123 = vld [vmem:[%s3] sm:$0xf]
    %v124 = vld [vmem:[%s3 + $0x4] sm:$0xf]
    %v125 = vld [vmem:[%s1] sm:$0xf]
    %v128 = vunpack.c.l.b16 %v123
    %v129 = vunpack.c.l.b16 %v124
    %v130 = vpack.c.b16 %v129, %v128
    %v132 = vsel %vm38, %v130, 0
    %vm134 = vcmask 1043456
    %v136 = vsel %vm134, %v125, 0
    %138 = vmatprep.subr.bf16.mxu0 0
    %139 = vmatpush1.bf16.msra.mxu0 %v136
    %140 = vmatprep.subr.bf16.mxu0 0
    %141 = vmatpush1.bf16.msra.mxu0 0
    %142 = vmatprep.subr.bf16.mxu0 0
    %143 = vmatpush1.bf16.msra.mxu0 0
    %144 = vmatprep.subr.bf16.mxu0 0
    %145 = vmatpush1.bf16.msra.mxu0 0
    %146 = vmatprep.subr.bf16.mxu0 0
    %147 = vmatpush1.bf16.msra.mxu0 0
    %148 = vmatprep.subr.bf16.mxu0 0
    %149 = vmatpush1.bf16.msra.mxu0 0
    %150 = vmatprep.subr.bf16.mxu0 0
    %151 = vmatpush1.bf16.msra.mxu0 0
    %152 = vmatprep.subr.bf16.mxu0 0
    %153 = vmatpush1.bf16.msra.mxu0 0
    %154 = vmatprep.subr.bf16.mxu0 0
    %155 = vmatpush1.bf16.msra.mxu0 0
    %156 = vmatprep.subr.bf16.mxu0 0
    %157 = vmatpush1.bf16.msra.mxu0 0
    %158 = vmatprep.subr.bf16.mxu0 0
    %159 = vmatpush1.bf16.msra.mxu0 0
    %160 = vmatprep.subr.bf16.mxu0 0
    %161 = vmatpush1.bf16.msra.mxu0 0
    %162 = vmatprep.subr.bf16.mxu0 0
    %163 = vmatpush1.bf16.msra.mxu0 0
    %164 = vmatprep.subr.bf16.mxu0 0
    %165 = vmatpush1.bf16.msra.mxu0 0
    %166 = vmatprep.subr.bf16.mxu0 0
    %167 = vmatpush1.bf16.msra.mxu0 0
    %168 = vmatprep.subr.bf16.mxu0 0
    %169 = vmatpush1.bf16.msra.mxu0 0
    %170 = vmatprep.mubr.bf16.mxu0 0
    %171 = vmatmul.mubr.bf16.gmra.mrb[0].mxu0 %v132
    %v172 = vpop.f32.mrb[0].mxu0
    %v173 = vadd.f32 0.0, %v172
    %v174 = vpop.f32.mrb[0].mxu0
    %v175 = vpop.f32.mrb[0].mxu0
    %v176 = vadd.f32 0.0, %v175
    %v177 = vpop.f32.mrb[0].mxu0
    %178 = vdwg.mxu0
    %v179 = vld [vmem:[#allocation2] sm:$0xff]
    %v180 = vld [vmem:[#allocation2 + $0x8] sm:$0xff]
    %v181 = vadd.f32 %v112, %v173
    %v182 = vadd.f32 %v117, %v176
    %v183 = vmax.f32 %v181, 0.0
    %v184 = vmax.f32 %v182, 0.0
    %v185 = vadd.f32 %v179, %v183
    %v186 = vadd.f32 %v180, %v184
    %187 = vst.msk [vmem:[#allocation2] sm:$0xff] %vm120, %v185
    %188 = vst.msk [vmem:[#allocation2 + $0x8] sm:$0xff] %vm120, %v186
    %v189 = vld [vmem:[%s3] sm:$0xf]
    %v190 = vld [vmem:[%s3 + $0x4] sm:$0xf]
    %s191 = scalar_lea.vmem %s1, 4
    %v192 = vld [vmem:[%s191] sm:$0xf]
    %v195 = vunpack.c.l.b16 %v189
    %v196 = vunpack.c.l.b16 %v190
    %v197 = vpack.c.b16 %v196, %v195
    %v199 = vsel %vm38, %v197, 0
    %v202 = vsel %vm134, %v192, 0
    %204 = vmatprep.subr.bf16.mxu0 0
    %205 = vmatpush1.bf16.msra.mxu0 %v202
    %206 = vmatprep.subr.bf16.mxu0 0
    %207 = vmatpush1.bf16.msra.mxu0 0
    %208 = vmatprep.subr.bf16.mxu0 0
    %209 = vmatpush1.bf16.msra.mxu0 0
    %210 = vmatprep.subr.bf16.mxu0 0
    %211 = vmatpush1.bf16.msra.mxu0 0
    %212 = vmatprep.subr.bf16.mxu0 0
    %213 = vmatpush1.bf16.msra.mxu0 0
    %214 = vmatprep.subr.bf16.mxu0 0
    %215 = vmatpush1.bf16.msra.mxu0 0
    %216 = vmatprep.subr.bf16.mxu0 0
    %217 = vmatpush1.bf16.msra.mxu0 0
    %218 = vmatprep.subr.bf16.mxu0 0
    %219 = vmatpush1.bf16.msra.mxu0 0
    %220 = vmatprep.subr.bf16.mxu0 0
    %221 = vmatpush1.bf16.msra.mxu0 0
    %222 = vmatprep.subr.bf16.mxu0 0
    %223 = vmatpush1.bf16.msra.mxu0 0
    %224 = vmatprep.subr.bf16.mxu0 0
    %225 = vmatpush1.bf16.msra.mxu0 0
    %226 = vmatprep.subr.bf16.mxu0 0
    %227 = vmatpush1.bf16.msra.mxu0 0
    %228 = vmatprep.subr.bf16.mxu0 0
    %229 = vmatpush1.bf16.msra.mxu0 0
    %230 = vmatprep.subr.bf16.mxu0 0
    %231 = vmatpush1.bf16.msra.mxu0 0
    %232 = vmatprep.subr.bf16.mxu0 0
    %233 = vmatpush1.bf16.msra.mxu0 0
    %234 = vmatprep.subr.bf16.mxu0 0
    %235 = vmatpush1.bf16.msra.mxu0 0
    %236 = vmatprep.mubr.bf16.mxu0 0
    %237 = vmatmul.mubr.bf16.gmra.mrb[0].mxu0 %v199
    %v238 = vpop.f32.mrb[0].mxu0
    %v239 = vadd.f32 0.0, %v238
    %v240 = vpop.f32.mrb[0].mxu0
    %v241 = vpop.f32.mrb[0].mxu0
    %v242 = vadd.f32 0.0, %v241
    %v243 = vpop.f32.mrb[0].mxu0
    %244 = vdwg.mxu0
    %v245 = vld [vmem:[#allocation2] sm:$0xff]
    %v246 = vld [vmem:[#allocation2 + $0x8] sm:$0xff]
    %v247 = vadd.f32 %v112, %v239
    %v248 = vadd.f32 %v117, %v242
    %v249 = vmax.f32 %v247, 0.0
    %v250 = vmax.f32 %v248, 0.0
    %v251 = vadd.f32 %v245, %v249
    %v252 = vadd.f32 %v246, %v250
    %253 = vst.msk [vmem:[#allocation2] sm:$0xff] %vm120, %v251
    %254 = vst.msk [vmem:[#allocation2 + $0x8] sm:$0xff] %vm120, %v252
    %v255 = vld [vmem:[%s3] sm:$0xf]
    %v256 = vld [vmem:[%s3 + $0x4] sm:$0xf]
    %s257 = scalar_lea.vmem %s1, 8
    %v258 = vld [vmem:[%s257] sm:$0xf]
    %v261 = vunpack.c.l.b16 %v255
    %v262 = vunpack.c.l.b16 %v256
    %v263 = vpack.c.b16 %v262, %v261
    %v265 = vsel %vm38, %v263, 0
    %v268 = vsel %vm134, %v258, 0
    %270 = vmatprep.subr.bf16.mxu0 0
    %271 = vmatpush1.bf16.msra.mxu0 %v268
    %272 = vmatprep.subr.bf16.mxu0 0
    %273 = vmatpush1.bf16.msra.mxu0 0
    %274 = vmatprep.subr.bf16.mxu0 0
    %275 = vmatpush1.bf16.msra.mxu0 0
    %276 = vmatprep.subr.bf16.mxu0 0
    %277 = vmatpush1.bf16.msra.mxu0 0
    %278 = vmatprep.subr.bf16.mxu0 0
    %279 = vmatpush1.bf16.msra.mxu0 0
    %280 = vmatprep.subr.bf16.mxu0 0
    %281 = vmatpush1.bf16.msra.mxu0 0
    %282 = vmatprep.subr.bf16.mxu0 0
    %283 = vmatpush1.bf16.msra.mxu0 0
    %284 = vmatprep.subr.bf16.mxu0 0
    %285 = vmatpush1.bf16.msra.mxu0 0
    %286 = vmatprep.subr.bf16.mxu0 0
    %287 = vmatpush1.bf16.msra.mxu0 0
    %288 = vmatprep.subr.bf16.mxu0 0
    %289 = vmatpush1.bf16.msra.mxu0 0
    %290 = vmatprep.subr.bf16.mxu0 0
    %291 = vmatpush1.bf16.msra.mxu0 0
    %292 = vmatprep.subr.bf16.mxu0 0
    %293 = vmatpush1.bf16.msra.mxu0 0
    %294 = vmatprep.subr.bf16.mxu0 0
    %295 = vmatpush1.bf16.msra.mxu0 0
    %296 = vmatprep.subr.bf16.mxu0 0
    %297 = vmatpush1.bf16.msra.mxu0 0
    %298 = vmatprep.subr.bf16.mxu0 0
    %299 = vmatpush1.bf16.msra.mxu0 0
    %300 = vmatprep.subr.bf16.mxu0 0
    %301 = vmatpush1.bf16.msra.mxu0 0
    %302 = vmatprep.mubr.bf16.mxu0 0
    %303 = vmatmul.mubr.bf16.gmra.mrb[0].mxu0 %v265
    %v304 = vpop.f32.mrb[0].mxu0
    %v305 = vadd.f32 0.0, %v304
    %v306 = vpop.f32.mrb[0].mxu0
    %v307 = vpop.f32.mrb[0].mxu0
    %v308 = vadd.f32 0.0, %v307
    %v309 = vpop.f32.mrb[0].mxu0
    %310 = vdwg.mxu0
    %v311 = vld [vmem:[#allocation2] sm:$0xff]
    %v312 = vld [vmem:[#allocation2 + $0x8] sm:$0xff]
    %v313 = vadd.f32 %v112, %v305
    %v314 = vadd.f32 %v117, %v308
    %v315 = vmax.f32 %v313, 0.0
    %v316 = vmax.f32 %v314, 0.0
    %v317 = vadd.f32 %v311, %v315
    %v318 = vadd.f32 %v312, %v316
    %319 = vst.msk [vmem:[#allocation2] sm:$0xff] %vm120, %v317
    %320 = vst.msk [vmem:[#allocation2 + $0x8] sm:$0xff] %vm120, %v318
    %v321 = vld [vmem:[%s3] sm:$0xf]
    %v322 = vld [vmem:[%s3 + $0x4] sm:$0xf]
    %s323 = scalar_lea.vmem %s1, 12
    %v324 = vld [vmem:[%s323] sm:$0xf]
    %v327 = vunpack.c.l.b16 %v321
    %v328 = vunpack.c.l.b16 %v322
    %v329 = vpack.c.b16 %v328, %v327
    %v331 = vsel %vm38, %v329, 0
    %v334 = vsel %vm134, %v324, 0
    %336 = vmatprep.subr.bf16.mxu0 0
    %337 = vmatpush1.bf16.msra.mxu0 %v334
    %338 = vmatprep.subr.bf16.mxu0 0
    %339 = vmatpush1.bf16.msra.mxu0 0
    %340 = vmatprep.subr.bf16.mxu0 0
    %341 = vmatpush1.bf16.msra.mxu0 0
    %342 = vmatprep.subr.bf16.mxu0 0
    %343 = vmatpush1.bf16.msra.mxu0 0
    %344 = vmatprep.subr.bf16.mxu0 0
    %345 = vmatpush1.bf16.msra.mxu0 0
    %346 = vmatprep.subr.bf16.mxu0 0
    %347 = vmatpush1.bf16.msra.mxu0 0
    %348 = vmatprep.subr.bf16.mxu0 0
    %349 = vmatpush1.bf16.msra.mxu0 0
    %350 = vmatprep.subr.bf16.mxu0 0
    %351 = vmatpush1.bf16.msra.mxu0 0
    %352 = vmatprep.subr.bf16.mxu0 0
    %353 = vmatpush1.bf16.msra.mxu0 0
    %354 = vmatprep.subr.bf16.mxu0 0
    %355 = vmatpush1.bf16.msra.mxu0 0
    %356 = vmatprep.subr.bf16.mxu0 0
    %357 = vmatpush1.bf16.msra.mxu0 0
    %358 = vmatprep.subr.bf16.mxu0 0
    %359 = vmatpush1.bf16.msra.mxu0 0
    %360 = vmatprep.subr.bf16.mxu0 0
    %361 = vmatpush1.bf16.msra.mxu0 0
    %362 = vmatprep.subr.bf16.mxu0 0
    %363 = vmatpush1.bf16.msra.mxu0 0
    %364 = vmatprep.subr.bf16.mxu0 0
    %365 = vmatpush1.bf16.msra.mxu0 0
    %366 = vmatprep.subr.bf16.mxu0 0
    %367 = vmatpush1.bf16.msra.mxu0 0
    %368 = vmatprep.mubr.bf16.mxu0 0
    %369 = vmatmul.mubr.bf16.gmra.mrb[0].mxu0 %v331
    %v370 = vpop.f32.mrb[0].mxu0
    %v371 = vadd.f32 0.0, %v370
    %v372 = vpop.f32.mrb[0].mxu0
    %v373 = vpop.f32.mrb[0].mxu0
    %v374 = vadd.f32 0.0, %v373
    %v375 = vpop.f32.mrb[0].mxu0
    %376 = vdwg.mxu0
    %v377 = vld [vmem:[#allocation2] sm:$0xff]
    %v378 = vld [vmem:[#allocation2 + $0x8] sm:$0xff]
    %v379 = vadd.f32 %v112, %v371
    %v380 = vadd.f32 %v117, %v374
    %v381 = vmax.f32 %v379, 0.0
    %v382 = vmax.f32 %v380, 0.0
    %v383 = vadd.f32 %v377, %v381
    %v384 = vadd.f32 %v378, %v382
    %385 = vst.msk [vmem:[#allocation2] sm:$0xff] %vm120, %v383
    %386 = vst.msk [vmem:[#allocation2 + $0x8] sm:$0xff] %vm120, %v384
    %v387 = vld [vmem:[#allocation2] sm:$0xff]
    %v388 = vld [vmem:[#allocation2 + $0x8] sm:$0xff]
    %v389 = vmul.f32 %v387, 0.25
    %v390 = vmul.f32 %v388, 0.25
    %391 = vst.msk [vmem:[#allocation2] sm:$0xff] %vm120, %v389
    %392 = vst.msk [vmem:[#allocation2 + $0x8] sm:$0xff] %vm120, %v390
    // Predicated region
    $region22: #{tpu_custom_call.1} parent=1 // pred_check
      _
    $region23: #{tpu_custom_call.1} parent=1 // pred_check_branch
      %394 = sbr.rel (0) target = $region25
    $region24: #{tpu_custom_call.1} parent=1 // pred_region
      %s396 = ssub.s32 256, 256
      %397 = vsyncadd [#allocation3], %s396
      %s398 = sshll.u32 [#allocation2], 4
      %s399 = int_to_ptr.vmem [resolvable:$true] %s398
      %404 = dma.vmem_to_hbm [thread:$0]  %s399, 256, %s5, [#allocation3], 128, 128, 8
    $region25: #{tpu_custom_call.1} parent=1 // pred_fallthru
      _
    // Predicated region
    $region26: #{tpu_custom_call.1} parent=1 // pred_check
      _
    $region27: #{tpu_custom_call.1} parent=1 // pred_check_branch
      %406 = sbr.rel (0) target = $region29
    $region28: #{tpu_custom_call.1} parent=1 // pred_region
      %407 = dma.done [#allocation3], 256
    $region29: #{tpu_custom_call.1} parent=1 // pred_fallthru
      _
    %408 = vsyncpa [#allocation3], 1

</llo_original>
